<compile_context>
chip_gen: v7x
topology: tpu7x:2x2x1
jax: 0.10.0
libtpu: 0.0.40
codegen_flags: <defaults>
</compile_context>

<pallas_src>
import jax
import jax.numpy as jnp
from jax.experimental import pallas as pl
from jax.experimental.pallas import tpu as pltpu


def _round_up(a, b):
    return (a + b - 1) // b * b


def qlinear_qat_kernel(scale_ref, x_ref, wt_ref, qs_ref, b_ref, o_ref, acc_ref):
    """One (tm, tn) output tile, accumulated across the K grid axis.

    scale_ref : SMEM f32[2]      [0] = 127/clampv, [1] = clampv/127 (dynamic)
    x_ref     : VMEM bf16[tm,tk] activations
    wt_ref    : VMEM bf16[tk,tn] pre-fake-quantized weights (int8 values), transposed
    qs_ref    : VMEM f32 [1, tn] per-output-channel weight scale
    b_ref     : VMEM f32 [1, tn] bias
    o_ref     : VMEM bf16[tm,tn] output tile
    acc_ref   : VMEM f32 [tm,tn] accumulator scratch (resident across K steps)
    """
    k = pl.program_id(2)

    @pl.when(k == 0)
    def _():
        acc_ref[...] = jnp.zeros_like(acc_ref)

    # Activation fake-quant. The resulting int8 values are held in bf16 (exact
    # for |v| <= 128), so the matmul runs at native bf16 MXU rate while the
    # f32 accumulation keeps the int8 x int8 arithmetic exact.
    x8 = jnp.clip(
        jnp.round(x_ref[...].astype(jnp.float32) * scale_ref[0]), -128.0, 127.0
    ).astype(jnp.bfloat16)

    acc_ref[...] += jnp.dot(x8, wt_ref[...], preferred_element_type=jnp.float32)

    @pl.when(k == pl.num_programs(2) - 1)
    def _():
        # Fused dequant epilogue: scale_row = (clampv/127) * qscales, applied
        # once (single broadcast multiply + single broadcast add).
        scale_row = scale_ref[1] * qs_ref[...]                 # (1, tn) f32
        o_ref[...] = (acc_ref[...] * scale_row + b_ref[...]).astype(o_ref.dtype)


def qlinear_qat_forward(x, weight, qscales, bias, *, tm=256, tn=512, tk=512):
    """x: (..., K) bf16; weight: (N, K) bf16; qscales: (N, 1) bf16; bias: (N,) bf16."""
    N, K = weight.shape
    out_shape = x.shape[:-1] + (N,)

    xm = x.reshape(-1, K)
    M = xm.shape[0]

    # Dynamic activation clamp (matches torch: clampv = input.max()).
    # TODO(synk): module uses max(x) (not abs-max); all-negative / all-zero
    # activations give a degenerate scale exactly as in the torch reference.
    clampv = jnp.max(xm).astype(jnp.float32)
    scales = jnp.stack([127.0 / clampv, clampv / 127.0]).astype(jnp.float32)

    # Static weight fake-quant hoisted out of the kernel (weights / qscales are
    # constants per call); the resulting integers are exact in bf16.
    w8 = jnp.clip(
        jnp.round((weight / qscales).astype(jnp.float32)), -128.0, 127.0
    ).astype(jnp.bfloat16)
    wt8 = w8.T                                                  # (K, N)

    if bias is None:
        bias = jnp.zeros((N,), dtype=jnp.float32)
    qs_row = qscales.reshape(1, N).astype(jnp.float32)
    b_row = bias.reshape(1, N).astype(jnp.float32)

    # Tile sizes clipped to the (padded) problem size. Lane dims stay multiples
    # of 128 (lane-dense stores), sublane dims multiples of 8.
    tm = min(tm, _round_up(M, 8))
    tn = min(tn, _round_up(N, 128))
    tk = min(tk, _round_up(K, 128))
    Mp, Np, Kp = _round_up(M, tm), _round_up(N, tn), _round_up(K, tk)

    # Zero padding is exact: padded x columns quantize to 0 and padded weight
    # rows are 0, contributing nothing to the dot; padded M/N rows/cols are
    # sliced off below.
    xm_p = jnp.pad(xm, ((0, Mp - M), (0, Kp - K))).astype(jnp.bfloat16)
    wt_p = jnp.pad(wt8, ((0, Kp - K), (0, Np - N)))
    qs_p = jnp.pad(qs_row, ((0, 0), (0, Np - N)))
    b_p = jnp.pad(b_row, ((0, 0), (0, Np - N)))

    grid = (Mp // tm, Np // tn, Kp // tk)

    out = pl.pallas_call(
        qlinear_qat_kernel,
        out_shape=jax.ShapeDtypeStruct((Mp, Np), jnp.bfloat16),
        grid_spec=pltpu.PrefetchScalarGridSpec(
            num_scalar_prefetch=1,                              # scales -> SMEM
            grid=grid,
            in_specs=[
                pl.BlockSpec((tm, tk), lambda i, j, k, s: (i, k)),  # x
                pl.BlockSpec((tk, tn), lambda i, j, k, s: (k, j)),  # w8^T
                pl.BlockSpec((1, tn), lambda i, j, k, s: (0, j)),   # qscales
                pl.BlockSpec((1, tn), lambda i, j, k, s: (0, j)),   # bias
            ],
            out_specs=pl.BlockSpec((tm, tn), lambda i, j, k, s: (i, j)),
            scratch_shapes=[pltpu.VMEM((tm, tn), jnp.float32)],
        ),
        compiler_params=pltpu.CompilerParams(
            dimension_semantics=("parallel", "parallel", "arbitrary"),
            vmem_limit_bytes=32 * 1024 * 1024,  # safe on v5e/v6e/v7x; tiles use ~3 MiB
        ),
    )(scales, xm_p, wt_p, qs_p, b_p)

    return out[:M, :N].reshape(out_shape)


def reference_forward(x, weight, qscales, bias):
    """Pure-JAX reference mirroring the torch eval forward."""
    N, K = weight.shape
    xm = x.reshape(-1, K).astype(jnp.float32)
    clampv = jnp.max(xm)
    x8 = jnp.clip(jnp.round(xm * 127.0 / clampv), -128.0, 127.0)
    w8 = jnp.clip(
        jnp.round((weight / qscales).astype(jnp.float32)), -128.0, 127.0
    )
    acc = x8 @ w8.T
    qs = qscales.reshape(-1).astype(jnp.float32)
    out = acc * (clampv / 127.0) * qs[None, :] + bias.astype(jnp.float32)[None, :]
    return out.astype(jnp.bfloat16).reshape(x.shape[:-1] + (N,))


if __name__ == "__main__":
    # Small shapes that still exercise padding, multiple N tiles and a
    # multi-step K accumulation when called with small tiles.
    B, S = 2, 5          # batch, seq  -> M = 10  (pads to 16 with tm=8)
    K = 200              # input_features        (pads to 256 -> 2 K-steps with tk=128)
    N = 320              # output_features       (pads to 384 -> 3 N tiles with tn=128)

    key = jax.random.PRNGKey(0)
    kx, kw, kb = jax.random.split(key, 3)

    x = jax.random.normal(kx, (B, S, K), dtype=jnp.float32).astype(jnp.bfloat16)
    weight = (0.05 * jax.random.normal(kw, (N, K), dtype=jnp.float32)).astype(jnp.bfloat16)
    bias = (0.1 * jax.random.normal(kb, (N,), dtype=jnp.float32)).astype(jnp.bfloat16)
    # Per-output-channel weight scale (what calibration would produce).
    qscales = (
        jnp.maximum(jnp.max(jnp.abs(weight.astype(jnp.float32)), axis=1, keepdims=True), 1e-5)
        / 127.0
    ).astype(jnp.bfloat16)

    out = qlinear_qat_forward(x, weight, qscales, bias, tm=8, tn=128, tk=128)
    out = jax.block_until_ready(out)

    ref = reference_forward(x, weight, qscales, bias)
    assert out.shape == (B, S, N)
    assert out.dtype == jnp.bfloat16
    err = jnp.max(jnp.abs(out.astype(jnp.float32) - ref.astype(jnp.float32)))
    assert float(err) < 5e-2, f"mismatch vs reference: {float(err)}"

    print("KERNEL_OK")
</pallas_src>

<mosaic_0001>
module attributes {stable_mosaic.version = 11 : i64} {
  func.func @qlinear_qat_kernel(%arg0: i32, %arg1: i32, %arg2: i32, %arg3: memref<2xf32, #tpu.memory_space<smem>>, %arg4: memref<8x128xbf16, #tpu.memory_space<vmem>>, %arg5: memref<128x128xbf16, #tpu.memory_space<vmem>>, %arg6: memref<1x128xf32, #tpu.memory_space<vmem>>, %arg7: memref<1x128xf32, #tpu.memory_space<vmem>>, %arg8: memref<8x128xbf16, #tpu.memory_space<vmem>>, %arg9: memref<8x128xf32, #tpu.memory_space<vmem>>) attributes {dimension_semantics = [#tpu.dimension_semantics<parallel>, #tpu.dimension_semantics<parallel>, #tpu.dimension_semantics<arbitrary>], iteration_bounds = array<i64: 2, 3, 2>, scalar_prefetch = 1 : i64, scratch_operands = 1 : i64, tpu.core_type = #tpu.core_type<tc>, window_params = [{transform_indices = @transform_0, window_bounds = array<i64: 8, 128>}, {transform_indices = @transform_1, window_bounds = array<i64: 128, 128>}, {transform_indices = @transform_2, window_bounds = array<i64: 1, 128>}, {transform_indices = @transform_3, window_bounds = array<i64: 1, 128>}, {transform_indices = @transform_4, window_bounds = array<i64: 8, 128>}]} {
    %c0_i32 = arith.constant 0 : i32
    %0 = arith.cmpi eq, %arg2, %c0_i32 : i32
    %1 = arith.extui %0 : i1 to i32
    %c0_i32_0 = arith.constant 0 : i32
    %2 = arith.cmpi ne, %1, %c0_i32_0 : i32
    scf.if %2 {
      %cst_12 = arith.constant 0.000000e+00 : f32
      %22 = vector.broadcast %cst_12 : f32 to vector<8x128xf32>
      %c0_13 = arith.constant 0 : index
      %c0_14 = arith.constant 0 : index
      %23 = vector.load %arg9[%c0_13, %c0_14] : memref<8x128xf32, #tpu.memory_space<vmem>>, vector<8x128xf32>
      tpu.vector_store %arg9[%c0_13, %c0_14], %22 {strides = array<i32>} : memref<8x128xf32, #tpu.memory_space<vmem>>, vector<8x128xf32>,
    } else {
    }
    %c0 = arith.constant 0 : index
    %c0_1 = arith.constant 0 : index
    %3 = vector.load %arg4[%c0, %c0_1] : memref<8x128xbf16, #tpu.memory_space<vmem>>, vector<8x128xbf16>
    %4 = arith.extf %3 : vector<8x128xbf16> to vector<8x128xf32>
    %c0_2 = arith.constant 0 : index
    %5 = memref.load %arg3[%c0_2] : memref<2xf32, #tpu.memory_space<smem>>
    %6 = vector.broadcast %5 : f32 to vector<8x128xf32>
    %7 = arith.mulf %4, %6 : vector<8x128xf32>
    %8 = math.roundeven %7 : vector<8x128xf32>
    %cst = arith.constant -1.280000e+02 : f32
    %cst_3 = arith.constant 1.270000e+02 : f32
    %9 = vector.broadcast %cst : f32 to vector<8x128xf32>
    %10 = arith.maximumf %9, %8 : vector<8x128xf32>
    %11 = vector.broadcast %cst_3 : f32 to vector<8x128xf32>
    %12 = arith.minimumf %11, %10 : vector<8x128xf32>
    %13 = arith.truncf %12 : vector<8x128xf32> to vector<8x128xbf16>
    %c0_4 = arith.constant 0 : index
    %c0_5 = arith.constant 0 : index
    %14 = vector.load %arg9[%c0_4, %c0_5] : memref<8x128xf32, #tpu.memory_space<vmem>>, vector<8x128xf32>
    %c0_6 = arith.constant 0 : index
    %c0_7 = arith.constant 0 : index
    %15 = vector.load %arg5[%c0_6, %c0_7] : memref<128x128xbf16, #tpu.memory_space<vmem>>, vector<128x128xbf16>
    %cst_8 = arith.constant dense<0.000000e+00> : vector<8x128xf32>
    %16 = tpu.matmul %13, %15, %cst_8 {dimension_numbers = #tpu.dot_dimension_numbers<[1], [0], [0], [1], [0, 0, 1, 1], [], []>} : vector<8x128xbf16>, vector<128x128xbf16>, vector<8x128xf32> -> vector<8x128xf32>
    %17 = arith.addf %14, %16 : vector<8x128xf32>
    %c0_9 = arith.constant 0 : index
    %c0_10 = arith.constant 0 : index
    %18 = vector.load %arg9[%c0_9, %c0_10] : memref<8x128xf32, #tpu.memory_space<vmem>>, vector<8x128xf32>
    tpu.vector_store %arg9[%c0_9, %c0_10], %17 {strides = array<i32>} : memref<8x128xf32, #tpu.memory_space<vmem>>, vector<8x128xf32>,
    %c1_i32 = arith.constant 1 : i32
    %19 = arith.cmpi eq, %arg2, %c1_i32 : i32
    %20 = arith.extui %19 : i1 to i32
    %c0_i32_11 = arith.constant 0 : i32
    %21 = arith.cmpi ne, %20, %c0_i32_11 : i32
    scf.if %21 {
      %c1 = arith.constant 1 : index
      %22 = memref.load %arg3[%c1] : memref<2xf32, #tpu.memory_space<smem>>
      %c0_12 = arith.constant 0 : index
      %c0_13 = arith.constant 0 : index
      %23 = vector.load %arg6[%c0_12, %c0_13] : memref<1x128xf32, #tpu.memory_space<vmem>>, vector<1x128xf32>
      %24 = vector.broadcast %22 : f32 to vector<1x128xf32>
      %25 = arith.mulf %24, %23 : vector<1x128xf32>
      %c0_14 = arith.constant 0 : index
      %c0_15 = arith.constant 0 : index
      %26 = vector.load %arg9[%c0_14, %c0_15] : memref<8x128xf32, #tpu.memory_space<vmem>>, vector<8x128xf32>
      %27 = vector.broadcast %25 : vector<1x128xf32> to vector<8x128xf32>
      %28 = arith.mulf %26, %27 : vector<8x128xf32>
      %c0_16 = arith.constant 0 : index
      %c0_17 = arith.constant 0 : index
      %29 = vector.load %arg7[%c0_16, %c0_17] : memref<1x128xf32, #tpu.memory_space<vmem>>, vector<1x128xf32>
      %30 = vector.broadcast %29 : vector<1x128xf32> to vector<8x128xf32>
      %31 = arith.addf %28, %30 : vector<8x128xf32>
      %32 = arith.truncf %31 : vector<8x128xf32> to vector<8x128xbf16>
      %c0_18 = arith.constant 0 : index
      %c0_19 = arith.constant 0 : index
      %33 = vector.load %arg8[%c0_18, %c0_19] : memref<8x128xbf16, #tpu.memory_space<vmem>>, vector<8x128xbf16>
      tpu.vector_store %arg8[%c0_18, %c0_19], %32 {strides = array<i32>} : memref<8x128xbf16, #tpu.memory_space<vmem>>, vector<8x128xbf16>,
    } else {
    }
    return
  }
  func.func @transform_0(%arg0: i32, %arg1: i32, %arg2: i32, %arg3: memref<2xf32, #tpu.memory_space<smem>>) -> (i32, i32) {
    %c0_i32 = arith.constant 0 : i32
    return %arg0, %arg2 : i32, i32
  }
  func.func @transform_1(%arg0: i32, %arg1: i32, %arg2: i32, %arg3: memref<2xf32, #tpu.memory_space<smem>>) -> (i32, i32) {
    %c0_i32 = arith.constant 0 : i32
    return %arg2, %arg1 : i32, i32
  }
  func.func @transform_2(%arg0: i32, %arg1: i32, %arg2: i32, %arg3: memref<2xf32, #tpu.memory_space<smem>>) -> (i32, i32) {
    %c0_i32 = arith.constant 0 : i32
    %c0_i32_0 = arith.constant 0 : i32
    return %c0_i32, %arg1 : i32, i32
  }
  func.func @transform_3(%arg0: i32, %arg1: i32, %arg2: i32, %arg3: memref<2xf32, #tpu.memory_space<smem>>) -> (i32, i32) {
    %c0_i32 = arith.constant 0 : i32
    %c0_i32_0 = arith.constant 0 : i32
    return %c0_i32, %arg1 : i32, i32
  }
  func.func @transform_4(%arg0: i32, %arg1: i32, %arg2: i32, %arg3: memref<2xf32, #tpu.memory_space<smem>>) -> (i32, i32) {
    %c0_i32 = arith.constant 0 : i32
    return %arg0, %arg1 : i32, i32
  }
}

</mosaic_0001>

<llo_original>
// kernel: tpu_custom_call.1
$region0: #{tpu_custom_call.1}
  #allocation0 [shape = 'u32[]', space=smem, size = 0x4, offset = 0x4, fixed_abs, tag = 'smem constant byte address 0x4 - core index']
  #allocation1 [shape = 'u32[144,128]{1,0:T(1,128)}', space=vmem, size = 0x12000, scoped, tag = 'internal scratch']
  #allocation2 [shape = 'f32[8,128]{1,0:T(8,128)}', space=vmem, size = 0x1000, scoped, tag = 'scratch operand']
  #allocation3 [shape = 's32[1]{0}', space=sflag, size = 0x4, scoped, tag = 'scoped memory for tpu_custom_call.1']
  #allocation4 [shape = 'u8[512]{0}', space=smem, size = 0x200, scoped, tag = 'prefetched SMEM operand 0']
  %s0 = inlined_call_operand.hbm [shape: f32[2], index: 0, kind: input, shape index: {}]
  %s1 = inlined_call_operand.hbm [shape: bf16[16,256], index: 1, kind: input, shape index: {}]
  %s2 = inlined_call_operand.hbm [shape: bf16[256,384], index: 2, kind: input, shape index: {}]
  %s3 = inlined_call_operand.vmem [shape: f32[1,384], index: 3, kind: input, shape index: {}]
  %s4 = inlined_call_operand.vmem [shape: f32[1,384], index: 4, kind: input, shape index: {}]
  %s5 = inlined_call_operand.hbm [shape: bf16[16,384], index: 5, kind: output, shape index: {}]
  %s6 = sld [smem:[#allocation0]]
  $region65: #{tpu_custom_call.1} parent=0
    _
  %s8 = ssub.s32 1, %s6
  %s9 = scalar_select 0, %s8, %s6
  %11 = dma.hbm_to_smem %s0, 16, [#allocation4], [#allocation3]
  %12 = dma.done [#allocation3], 16
  %13 = sfence
  $region1: #{tpu_custom_call.1} parent=0
    #allocation5 [shape = 'u8[4096]{0}', space=vmem, size = 0x1000, scoped, tag = 'input window, operand 1']
    #allocation6 [shape = 's32[2]{0}', space=sflag, size = 0x8, scoped, tag = 'scoped memory for tpu_custom_call.1']
    #allocation7 [shape = 's32[2]{0}', space=sflag, size = 0x8, scoped, tag = 'scoped memory for tpu_custom_call.1']
    #allocation8 [shape = 'u8[65536]{0}', space=vmem, size = 0x10000, scoped, tag = 'input window, operand 2']
    #allocation9 [shape = 's32[2]{0}', space=sflag, size = 0x8, scoped, tag = 'scoped memory for tpu_custom_call.1']
    #allocation10 [shape = 'u8[4096]{0}', space=vmem, size = 0x1000, scoped, tag = 'output window, operand 0']
    %14 = vsyncpa [#allocation6], 0
    %s15 = scalar_lea.sflag [#allocation6], 1
    %16 = vsyncpa %s15, 0
    %17 = vsyncpa [#allocation9], 0
    %s18 = scalar_lea.sflag [#allocation9], 1
    %19 = vsyncpa %s18, 0
    %20 = vsyncpa [#allocation7], 0
    %s21 = scalar_lea.sflag [#allocation7], 1
    %22 = vsyncpa %s21, 0
    loop: start=0, step=1, limit=14
    $region2: #{tpu_custom_call.1} parent=1 // loop_pre_header
      _
    $region3: #{tpu_custom_call.1} parent=1 // loop_header
      %s24 = sphi 0, %s28
      %p25 = scmp.ge.s32.totalorder %s24, 14
      %s31 = sphi 0, %s50
      %s32 = sphi 0, %s46
      %s33 = sphi 0, %s42
      %s34 = sphi 0, %s31
      %s35 = sphi 0, %s32
      %s36 = sphi 0, %s33
      %s37 = sphi 0, %s34
      %s38 = sphi 0, %s35
      %s39 = sphi 0, %s36
      %s55 = sphi 0, %s57
      %s58 = sphi 0, %s55
      %s59 = sphi 0, %s58
      %s75 = sphi 0, %s59
      %s83 = sphi 0, %s85
      %s86 = sphi 0, %s83
      %s87 = sphi 0, %s86
      %s103 = sphi 0, %s87
      %s109 = sphi 0, %s111
      %s112 = sphi 0, %s109
      %s113 = sphi 0, %s112
      %s129 = sphi 0, %s113
      %s135 = sphi 0, %s137
      %s138 = sphi 0, %s135
      %s139 = sphi 0, %s138
      %s155 = sphi 0, %s139
      %s163 = sphi 0, %s165
      %s166 = sphi 0, %s163
      %s167 = sphi 0, %s166
      %s183 = sphi 0, %s167
    $region4: #{tpu_custom_call.1} parent=1 // loop_header_branch
      %27 = sbr.rel (%p25) target = $region8
    $region5: #{tpu_custom_call.1} parent=1 // loop_body
      %s29 = ssub.s32 %s24, 1
      %s30 = ssub.s32 %s24, 2
      %s40 = sadd.s32 1, %s33
      %p41 = scmp.ge.s32.totalorder %s40, 2
      %s42 = scalar_select %p41, 0, %s40
      %s43 = sadd.s32 1, %s32
      %s44 = scalar_select %p41, %s43, %s32
      %p45 = scmp.ge.s32.totalorder %s44, 3
      %s46 = scalar_select %p45, 0, %s44
      %s47 = sadd.s32 1, %s31
      %s48 = scalar_select %p45, %s47, %s31
      %p49 = scmp.ge.s32.totalorder %s48, 2
      %s50 = scalar_select %p49, 0, %s48
      %s51 = ssub.s32 %s31, %s50
      %s52 = ssub.s32 %s33, %s42
      %s53 = sor.u32 %s51, %s52
      %p54 = scmp.eq.s32.totalorder %s53, 0
      %s56 = sadd.s32 %s55, 1
      %s57 = scalar_select %p54, %s55, %s56
      %p60 = pneg %p54
      %p61 = scmp.eq.s32.totalorder %s24, 11
      %p62 = por %p60, %p61
      %p63 = scmp.ne.s32.totalorder %s55, %s58
      %p64 = scmp.eq.s32.totalorder %s24, 0
      %p65 = por %p63, %p64
      %p66 = scmp.ne.s32.totalorder %s55, %s58
      %p67 = scmp.eq.s32.totalorder %s29, 11
      %p68 = por %p66, %p67
      %p69 = scmp.ne.s32.totalorder %s58, %s59
      %p70 = scmp.eq.s32.totalorder %s29, 0
      %p71 = por %p69, %p70
      %p72 = scmp.ne.s32.totalorder %s58, %s59
      %p73 = scmp.eq.s32.totalorder %s30, 11
      %p74 = por %p72, %p73
      %p76 = scmp.ne.s32.totalorder %s59, %s75
      %p77 = scmp.eq.s32.totalorder %s30, 0
      %p78 = por %p76, %p77
      %s79 = ssub.s32 %s33, %s42
      %s80 = ssub.s32 %s32, %s46
      %s81 = sor.u32 %s79, %s80
      %p82 = scmp.eq.s32.totalorder %s81, 0
      %s84 = sadd.s32 %s83, 1
      %s85 = scalar_select %p82, %s83, %s84
      %p88 = pneg %p82
      %p89 = scmp.eq.s32.totalorder %s24, 11
      %p90 = por %p88, %p89
      %p91 = scmp.ne.s32.totalorder %s83, %s86
      %p92 = scmp.eq.s32.totalorder %s24, 0
      %p93 = por %p91, %p92
      %p94 = scmp.ne.s32.totalorder %s83, %s86
      %p95 = scmp.eq.s32.totalorder %s29, 11
      %p96 = por %p94, %p95
      %p97 = scmp.ne.s32.totalorder %s86, %s87
      %p98 = scmp.eq.s32.totalorder %s29, 0
      %p99 = por %p97, %p98
      %p100 = scmp.ne.s32.totalorder %s86, %s87
      %p101 = scmp.eq.s32.totalorder %s30, 11
      %p102 = por %p100, %p101
      %p104 = scmp.ne.s32.totalorder %s87, %s103
      %p105 = scmp.eq.s32.totalorder %s30, 0
      %p106 = por %p104, %p105
      %s107 = ssub.s32 %s32, %s46
      %p108 = scmp.eq.s32.totalorder %s107, 0
      %s110 = sadd.s32 %s109, 1
      %s111 = scalar_select %p108, %s109, %s110
      %p114 = pneg %p108
      %p115 = scmp.eq.s32.totalorder %s24, 11
      %p116 = por %p114, %p115
      %p117 = scmp.ne.s32.totalorder %s109, %s112
      %p118 = scmp.eq.s32.totalorder %s24, 0
      %p119 = por %p117, %p118
      %p120 = scmp.ne.s32.totalorder %s109, %s112
      %p121 = scmp.eq.s32.totalorder %s29, 11
      %p122 = por %p120, %p121
      %p123 = scmp.ne.s32.totalorder %s112, %s113
      %p124 = scmp.eq.s32.totalorder %s29, 0
      %p125 = por %p123, %p124
      %p126 = scmp.ne.s32.totalorder %s112, %s113
      %p127 = scmp.eq.s32.totalorder %s30, 11
      %p128 = por %p126, %p127
      %p130 = scmp.ne.s32.totalorder %s113, %s129
      %p131 = scmp.eq.s32.totalorder %s30, 0
      %p132 = por %p130, %p131
      %s133 = ssub.s32 %s32, %s46
      %p134 = scmp.eq.s32.totalorder %s133, 0
      %s136 = sadd.s32 %s135, 1
      %s137 = scalar_select %p134, %s135, %s136
      %p140 = pneg %p134
      %p141 = scmp.eq.s32.totalorder %s24, 11
      %p142 = por %p140, %p141
      %p143 = scmp.ne.s32.totalorder %s135, %s138
      %p144 = scmp.eq.s32.totalorder %s24, 0
      %p145 = por %p143, %p144
      %p146 = scmp.ne.s32.totalorder %s135, %s138
      %p147 = scmp.eq.s32.totalorder %s29, 11
      %p148 = por %p146, %p147
      %p149 = scmp.ne.s32.totalorder %s138, %s139
      %p150 = scmp.eq.s32.totalorder %s29, 0
      %p151 = por %p149, %p150
      %p152 = scmp.ne.s32.totalorder %s138, %s139
      %p153 = scmp.eq.s32.totalorder %s30, 11
      %p154 = por %p152, %p153
      %p156 = scmp.ne.s32.totalorder %s139, %s155
      %p157 = scmp.eq.s32.totalorder %s30, 0
      %p158 = por %p156, %p157
      %s159 = ssub.s32 %s31, %s50
      %s160 = ssub.s32 %s32, %s46
      %s161 = sor.u32 %s159, %s160
      %p162 = scmp.eq.s32.totalorder %s161, 0
      %s164 = sadd.s32 %s163, 1
      %s165 = scalar_select %p162, %s163, %s164
      %p168 = pneg %p162
      %p169 = scmp.eq.s32.totalorder %s24, 11
      %p170 = por %p168, %p169
      %p171 = scmp.ne.s32.totalorder %s163, %s166
      %p172 = scmp.eq.s32.totalorder %s24, 0
      %p173 = por %p171, %p172
      %p174 = scmp.ne.s32.totalorder %s163, %s166
      %p175 = scmp.eq.s32.totalorder %s29, 11
      %p176 = por %p174, %p175
      %p177 = scmp.ne.s32.totalorder %s166, %s167
      %p178 = scmp.eq.s32.totalorder %s29, 0
      %p179 = por %p177, %p178
      %p180 = scmp.ne.s32.totalorder %s166, %s167
      %p181 = scmp.eq.s32.totalorder %s30, 11
      %p182 = por %p180, %p181
      %p184 = scmp.ne.s32.totalorder %s167, %s183
      %p185 = scmp.eq.s32.totalorder %s30, 0
      %p186 = por %p184, %p185
      %p187 = scmp.le.s32.totalorder 1, %s24
      %p188 = scmp.lt.s32.totalorder %s24, 13
      %p189 = pnand %p187, %p188
      %p190 = pneg %p189
      // Predicated region
      $region9: #{tpu_custom_call.1} parent=5 // pred_check
        _
      $region10: #{tpu_custom_call.1} parent=5 // pred_check_branch
        %192 = sbr.rel (%p189) target = $region12
      $region11: #{tpu_custom_call.1} parent=5 // pred_region
        %s193 = ssub.s32 %s24, 1
      $region12: #{tpu_custom_call.1} parent=5 // pred_fallthru
        _
      %p194 = scmp.lt.s32.totalorder %s24, 12
      // Predicated region
      $region13: #{tpu_custom_call.1} parent=5 // pred_check
        %p195 = pneg %p194
      $region14: #{tpu_custom_call.1} parent=5 // pred_check_branch
        %197 = sbr.rel (%p195) target = $region16
      $region15: #{tpu_custom_call.1} parent=5 // pred_region
        // Predicated region
        $region17: #{tpu_custom_call.1} parent=15 // pred_check
          %p198 = pneg %p65
        $region18: #{tpu_custom_call.1} parent=15 // pred_check_branch
          %200 = sbr.rel (%p198) target = $region20
        $region19: #{tpu_custom_call.1} parent=15 // pred_region
          %s201 = sand.u32 %s55, 1
          %s202 = scalar_lea.sflag [#allocation6], %s201
          %s203 = sand.u32 %s55, 1
          %s204 = smul.addr %s203, 4
          %s205 = scalar_lea.vmem [#allocation5], %s204
          %s207 = ssub.s32 64, 64
          %208 = vsyncadd %s202, %s207
          %s209 = smul.addr %s31, 2
          %s210 = sadd.s32 %s33, %s209
          %s211 = smul.addr %s210, 64
          %s212 = scalar_lea.hbm %s1, %s211
          %s214 = sshll.u32 %s205, 4
          %s215 = int_to_ptr.vmem [resolvable:$true] %s214
          %217 = dma.hbm_to_vmem [thread:$0]  %s212, 64, %s215, %s202
        $region20: #{tpu_custom_call.1} parent=15 // pred_fallthru
          _
        // Predicated region
        $region21: #{tpu_custom_call.1} parent=15 // pred_check
          %p218 = pneg %p93
        $region22: #{tpu_custom_call.1} parent=15 // pred_check_branch
          %220 = sbr.rel (%p218) target = $region24
        $region23: #{tpu_custom_call.1} parent=15 // pred_region
          %s221 = sand.u32 %s83, 1
          %s222 = scalar_lea.sflag [#allocation9], %s221
          %s223 = sand.u32 %s83, 1
          %s224 = smul.addr %s223, 64
          %s225 = scalar_lea.vmem [#allocation8], %s224
          %s226 = smul.u32 16, %s33
          %s228 = ssub.s32 1024, 1024
          %229 = vsyncadd %s222, %s228
          %s230 = smul.addr %s226, 3
          %s231 = sadd.s32 %s32, %s230
          %s232 = smul.addr %s231, 64
          %s233 = scalar_lea.hbm %s2, %s232
          %s234 = sshll.u32 %s225, 4
          %s235 = int_to_ptr.vmem [resolvable:$true] %s234
          %240 = dma.hbm_to_vmem [thread:$0]  %s233, 1024, %s235, %s222, 192, 64, 4
        $region24: #{tpu_custom_call.1} parent=15 // pred_fallthru
          _
        // Predicated region
        $region25: #{tpu_custom_call.1} parent=15 // pred_check
          %p241 = pneg %p119
        $region26: #{tpu_custom_call.1} parent=15 // pred_check_branch
          %243 = sbr.rel (%p241) target = $region28
        $region27: #{tpu_custom_call.1} parent=15 // pred_region
          %p244 = scmp.lt.s32.totalorder %s32, 2
          %s245 = scalar_select %p244, %s32, 2
          %s246 = scalar_lea.vmem %s3, %s245
        $region28: #{tpu_custom_call.1} parent=15 // pred_fallthru
          _
        // Predicated region
        $region29: #{tpu_custom_call.1} parent=15 // pred_check
          %p247 = pneg %p145
        $region30: #{tpu_custom_call.1} parent=15 // pred_check_branch
          %249 = sbr.rel (%p247) target = $region32
        $region31: #{tpu_custom_call.1} parent=15 // pred_region
          %p250 = scmp.lt.s32.totalorder %s32, 2
          %s251 = scalar_select %p250, %s32, 2
          %s252 = scalar_lea.vmem %s4, %s251
        $region32: #{tpu_custom_call.1} parent=15 // pred_fallthru
          _
      $region16: #{tpu_custom_call.1} parent=5 // pred_fallthru
        _
      %p253 = scmp.le.s32.totalorder 1, %s24
      %p254 = scmp.lt.s32.totalorder %s24, 13
      %p255 = pnand %p253, %p254
      %p256 = pneg %p255
      // Predicated region
      $region33: #{tpu_custom_call.1} parent=5 // pred_check
        _
      $region34: #{tpu_custom_call.1} parent=5 // pred_check_branch
        %258 = sbr.rel (%p255) target = $region36
      $region35: #{tpu_custom_call.1} parent=5 // pred_region
        %s259 = ssub.s32 %s24, 1
        %s260 = sand.u32 %s58, 1
        %s261 = scalar_lea.sflag [#allocation6], %s260
        %s262 = sand.u32 %s58, 1
        %s263 = smul.addr %s262, 4
        %s264 = scalar_lea.vmem [#allocation5], %s263
        // Predicated region
        $region37: #{tpu_custom_call.1} parent=35 // pred_check
          %p265 = pneg %p71
        $region38: #{tpu_custom_call.1} parent=35 // pred_check_branch
          %267 = sbr.rel (%p265) target = $region40
        $region39: #{tpu_custom_call.1} parent=35 // pred_region
          %268 = dma.done %s261, 64
        $region40: #{tpu_custom_call.1} parent=35 // pred_fallthru
          _
        %s269 = sand.u32 %s86, 1
        %s270 = scalar_lea.sflag [#allocation9], %s269
        %s271 = sand.u32 %s86, 1
        %s272 = smul.addr %s271, 64
        %s273 = scalar_lea.vmem [#allocation8], %s272
        // Predicated region
        $region41: #{tpu_custom_call.1} parent=35 // pred_check
          %p274 = pneg %p99
        $region42: #{tpu_custom_call.1} parent=35 // pred_check_branch
          %276 = sbr.rel (%p274) target = $region44
        $region43: #{tpu_custom_call.1} parent=35 // pred_region
          %277 = dma.done %s270, 1024
        $region44: #{tpu_custom_call.1} parent=35 // pred_fallthru
          _
        %s278 = sand.u32 %s58, 1
        %s279 = scalar_lea.sflag [#allocation6], %s278
        %s280 = sand.u32 %s58, 1
        %s281 = smul.addr %s280, 4
        %s282 = scalar_lea.vmem [#allocation5], %s281
        %p283 = pneg %p71
        %p284 = pneg %p68
        %s285 = sand.u32 %s86, 1
        %s286 = scalar_lea.sflag [#allocation9], %s285
        %s287 = sand.u32 %s86, 1
        %s288 = smul.addr %s287, 64
        %s289 = scalar_lea.vmem [#allocation8], %s288
        %p290 = pneg %p99
        %p291 = pneg %p96
        %p292 = scmp.lt.s32.totalorder %s35, 2
        %s293 = scalar_select %p292, %s35, 2
        %s294 = scalar_lea.vmem %s3, %s293
        %p295 = pneg %p125
        %p296 = pneg %p122
        %p297 = scmp.lt.s32.totalorder %s35, 2
        %s298 = scalar_select %p297, %s35, 2
        %s299 = scalar_lea.vmem %s4, %s298
        %p300 = pneg %p151
        %p301 = pneg %p148
        %p302 = pneg %p179
        %p303 = pneg %p176
        %s304 = sand.u32 %s166, 1
        %s305 = scalar_lea.sflag [#allocation7], %s304
        %s306 = sand.u32 %s166, 1
        %s307 = smul.addr %s306, 4
        %s308 = scalar_lea.vmem [#allocation10], %s307
        %s309 = smul.u32 16, %s36
        %p310 = scmp.lt.s32.totalorder %s35, 2
        %s311 = scalar_select %p310, %s35, 2
        %s312 = scalar_lea.vmem %s3, %s311
        %p313 = scmp.lt.s32.totalorder %s35, 2
        %s314 = scalar_select %p313, %s35, 2
        %s315 = scalar_lea.vmem %s4, %s314
        %p317 = scmp.eq.s32.totalorder %s36, 0
        // Predicated region
        $region45: #{tpu_custom_call.1} parent=35 // pred_check
          %p318 = pneg %p317
        $region46: #{tpu_custom_call.1} parent=35 // pred_check_branch
          %320 = sbr.rel (%p318) target = $region48
        $region47: #{tpu_custom_call.1} parent=35 // pred_region
          %321 = vst [vmem:[#allocation2] sm:$0xff] 0.0
        $region48: #{tpu_custom_call.1} parent=35 // pred_fallthru
          _
        %v322 = vld [vmem:[%s264] sm:$0xf]
        %v323 = vunpack.c.l.bf16 %v322
        %s324 = sld [smem:[#allocation4]]
        %v325 = vstv %s324
        %v326 = vmul.f32 %v323, %v325
        %v327 = vround.ne.pseudo %v326
        %v328 = vmax.f32 %v327, -128.0
        %v329 = vmin.f32 %v328, 127.0
        %v330 = vpack.c.bf16 %v329, %v329
        %v331 = vld [vmem:[#allocation2] sm:$0xff]
        %v332 = vld [vmem:[%s273] sm:$0xf]
        %v333 = vld [vmem:[%s273 + $0x4] sm:$0xf]
        %v334 = vld [vmem:[%s273 + $0x8] sm:$0xf]
        %v335 = vld [vmem:[%s273 + $0xc] sm:$0xf]
        %v336 = vld [vmem:[%s273 + $0x10] sm:$0xf]
        %v337 = vld [vmem:[%s273 + $0x14] sm:$0xf]
        %v338 = vld [vmem:[%s273 + $0x18] sm:$0xf]
        %v339 = vld [vmem:[%s273 + $0x1c] sm:$0xf]
        %v340 = vld [vmem:[%s273 + $0x20] sm:$0xf]
        %v341 = vld [vmem:[%s273 + $0x24] sm:$0xf]
        %v342 = vld [vmem:[%s273 + $0x28] sm:$0xf]
        %v343 = vld [vmem:[%s273 + $0x2c] sm:$0xf]
        %v344 = vld [vmem:[%s273 + $0x30] sm:$0xf]
        %v345 = vld [vmem:[%s273 + $0x34] sm:$0xf]
        %v346 = vld [vmem:[%s273 + $0x38] sm:$0xf]
        %v347 = vld [vmem:[%s273 + $0x3c] sm:$0xf]
        %v364 = vunpack.c.l.b16 %v332
        %v365 = vunpack.c.l.b16 %v333
        %v366 = vunpack.c.l.b16 %v334
        %v367 = vunpack.c.l.b16 %v335
        %v368 = vunpack.c.l.b16 %v336
        %v369 = vunpack.c.l.b16 %v337
        %v370 = vunpack.c.l.b16 %v338
        %v371 = vunpack.c.l.b16 %v339
        %v372 = vunpack.c.l.b16 %v340
        %v373 = vunpack.c.l.b16 %v341
        %v374 = vunpack.c.l.b16 %v342
        %v375 = vunpack.c.l.b16 %v343
        %v376 = vunpack.c.l.b16 %v344
        %v377 = vunpack.c.l.b16 %v345
        %v378 = vunpack.c.l.b16 %v346
        %v379 = vunpack.c.l.b16 %v347
        %v380 = vpack.c.b16 %v365, %v364
        %v381 = vpack.c.b16 %v367, %v366
        %v382 = vpack.c.b16 %v369, %v368
        %v383 = vpack.c.b16 %v371, %v370
        %v384 = vpack.c.b16 %v373, %v372
        %v385 = vpack.c.b16 %v375, %v374
        %v386 = vpack.c.b16 %v377, %v376
        %v387 = vpack.c.b16 %v379, %v378
        %396 = vmatprep.subr.bf16.mxu0 0
        %397 = vmatpush1.bf16.msra.mxu0 %v380
        %398 = vmatprep.subr.bf16.mxu0 0
        %399 = vmatpush1.bf16.msra.mxu0 %v381
        %400 = vmatprep.subr.bf16.mxu0 0
        %401 = vmatpush1.bf16.msra.mxu0 %v382
        %402 = vmatprep.subr.bf16.mxu0 0
        %403 = vmatpush1.bf16.msra.mxu0 %v383
        %404 = vmatprep.subr.bf16.mxu0 0
        %405 = vmatpush1.bf16.msra.mxu0 %v384
        %406 = vmatprep.subr.bf16.mxu0 0
        %407 = vmatpush1.bf16.msra.mxu0 %v385
        %408 = vmatprep.subr.bf16.mxu0 0
        %409 = vmatpush1.bf16.msra.mxu0 %v386
        %410 = vmatprep.subr.bf16.mxu0 0
        %411 = vmatpush1.bf16.msra.mxu0 %v387
        %412 = vmatprep.subr.bf16.mxu0 0
        %413 = vmatpush1.bf16.msra.mxu0 0
        %414 = vmatprep.subr.bf16.mxu0 0
        %415 = vmatpush1.bf16.msra.mxu0 0
        %416 = vmatprep.subr.bf16.mxu0 0
        %417 = vmatpush1.bf16.msra.mxu0 0
        %418 = vmatprep.subr.bf16.mxu0 0
        %419 = vmatpush1.bf16.msra.mxu0 0
        %420 = vmatprep.subr.bf16.mxu0 0
        %421 = vmatpush1.bf16.msra.mxu0 0
        %422 = vmatprep.subr.bf16.mxu0 0
        %423 = vmatpush1.bf16.msra.mxu0 0
        %424 = vmatprep.subr.bf16.mxu0 0
        %425 = vmatpush1.bf16.msra.mxu0 0
        %426 = vmatprep.subr.bf16.mxu0 0
        %427 = vmatpush1.bf16.msra.mxu0 0
        %428 = vmatprep.mubr.bf16.mxu0 0
        %429 = vmatmul.mubr.bf16.gmra.mrb[0].mxu0 %v330
        %v430 = vpop.f32.mrb[0].mxu0
        %v431 = vadd.f32 0.0, %v430
        %v432 = vpop.f32.mrb[0].mxu0
        %v433 = vpop.f32.mrb[0].mxu0
        %v434 = vpop.f32.mrb[0].mxu0
        %435 = vdwg.mxu0
        %v436 = vadd.f32 %v331, %v431
        %437 = vst [vmem:[#allocation2] sm:$0xff] %v436
        %p438 = scmp.eq.s32.totalorder %s36, 1
        // Predicated region
        $region49: #{tpu_custom_call.1} parent=35 // pred_check
          %p439 = pneg %p438
        $region50: #{tpu_custom_call.1} parent=35 // pred_check_branch
          %441 = sbr.rel (%p439) target = $region52
        $region51: #{tpu_custom_call.1} parent=35 // pred_region
          %s442 = sld [smem:[#allocation4 + $0x1]]
          %v443 = vld [vmem:[%s312] sm:$0x1]
          %v444 = vstv %s442
          %v445 = vmul.f32 %v444, %v443
          %v446 = vld [vmem:[#allocation2] sm:$0xff]
          %v448 = vlaneseq
          %v449 = vshrl.u32 %v448, 7
          %v450 = vsub.s32 0, %v449
          %v451 = vrot.slane %v445, %v450
          %v453 = vmul.f32 %v446, %v451
          %v454 = vld [vmem:[%s315] sm:$0x1]
          %v456 = vlaneseq
          %v457 = vshrl.u32 %v456, 7
          %v458 = vsub.s32 0, %v457
          %v459 = vrot.slane %v454, %v458
          %v461 = vadd.f32 %v453, %v459
          %v462 = vpack.c.bf16 %v461, %v461
          %463 = vst [vmem:[%s308] sm:$0xf] %v462
        $region52: #{tpu_custom_call.1} parent=35 // pred_fallthru
          _
        %s464 = sand.u32 %s166, 1
        %s465 = scalar_lea.sflag [#allocation7], %s464
        %s466 = sand.u32 %s166, 1
        %s467 = smul.addr %s466, 4
        %s468 = scalar_lea.vmem [#allocation10], %s467
        // Predicated region
        $region53: #{tpu_custom_call.1} parent=35 // pred_check
          %p469 = pneg %p176
        $region54: #{tpu_custom_call.1} parent=35 // pred_check_branch
          %471 = sbr.rel (%p469) target = $region56
        $region55: #{tpu_custom_call.1} parent=35 // pred_region
          %s473 = ssub.s32 64, 64
          %474 = vsyncadd %s465, %s473
          %s475 = smul.addr %s34, 3
          %s476 = sadd.s32 %s35, %s475
          %s477 = smul.addr %s476, 64
          %s478 = scalar_lea.hbm %s5, %s477
          %s480 = sshll.u32 %s468, 4
          %s481 = int_to_ptr.vmem [resolvable:$true] %s480
          %483 = dma.vmem_to_hbm [thread:$0]  %s481, 64, %s478, %s465
        $region56: #{tpu_custom_call.1} parent=35 // pred_fallthru
          _
      $region36: #{tpu_custom_call.1} parent=5 // pred_fallthru
        _
      %p484 = scmp.le.s32.totalorder 2, %s24
      // Predicated region
      $region57: #{tpu_custom_call.1} parent=5 // pred_check
        %p485 = pneg %p484
      $region58: #{tpu_custom_call.1} parent=5 // pred_check_branch
        %487 = sbr.rel (%p485) target = $region60
      $region59: #{tpu_custom_call.1} parent=5 // pred_region
        %s488 = ssub.s32 %s24, 2
        // Predicated region
        $region61: #{tpu_custom_call.1} parent=59 // pred_check
          %p489 = pneg %p182
        $region62: #{tpu_custom_call.1} parent=59 // pred_check_branch
          %491 = sbr.rel (%p489) target = $region64
        $region63: #{tpu_custom_call.1} parent=59 // pred_region
          %s492 = sand.u32 %s167, 1
          %s493 = scalar_lea.sflag [#allocation7], %s492
          %s494 = sand.u32 %s167, 1
          %s495 = smul.addr %s494, 4
          %s496 = scalar_lea.vmem [#allocation10], %s495
          %497 = dma.done %s493, 64
        $region64: #{tpu_custom_call.1} parent=59 // pred_fallthru
          _
      $region60: #{tpu_custom_call.1} parent=5 // pred_fallthru
        _
    $region6: #{tpu_custom_call.1} parent=1 // loop_footer
      %s28 = sadd.s32 1, %s24
    $region7: #{tpu_custom_call.1} parent=1 // loop_footer_branch
      %23 = sbr.rel target = $region3
    $region8: #{tpu_custom_call.1} parent=1 // loop_exit
      _
    %498 = vsyncpa [#allocation6], 1
    %s499 = scalar_lea.sflag [#allocation6], 1
    %500 = vsyncpa %s499, 1
    %501 = vsyncpa [#allocation9], 1
    %s502 = scalar_lea.sflag [#allocation9], 1
    %503 = vsyncpa %s502, 1
    %504 = vsyncpa [#allocation7], 1
    %s505 = scalar_lea.sflag [#allocation7], 1
    %506 = vsyncpa %s505, 1

</llo_original>
